<compile_context>
chip_gen: v6e
topology: v6e:2x2x1
jax: 0.10.0
libtpu: 0.0.40
codegen_flags: <defaults>
</compile_context>

<pallas_src>
import math
from functools import partial

import jax
import jax.numpy as jnp
from jax.experimental import pallas as pl
from jax.experimental.pallas import tpu as pltpu


def _round_up(x, m):
    return (x + m - 1) // m * m


def _cdiv(a, b):
    return (a + b - 1) // b


# ----------------------------- Pallas kernel ---------------------------------
def _patch_proj_kernel(patches_ref, weight_ref, bias_ref, out_ref):
    # patches_ref: (tm, K_pad)   weight_ref: (K_pad, N_pad)  [resident]
    # bias_ref:    (1, N_pad) f32 [resident]                 out_ref: (tm, N_pad)
    acc = jnp.dot(patches_ref[...], weight_ref[...],
                  preferred_element_type=jnp.float32)
    out_ref[...] = (acc + bias_ref[...]).astype(out_ref.dtype)


def _patch_projection(patches, weight_kn, bias_2d, out_dtype, n_out):
    """patches: (M, K), weight_kn: (K_pad, N_pad), bias_2d: (1, N_pad) f32 -> (M, n_out)."""
    M, K = patches.shape
    K_pad, N_pad = weight_kn.shape

    in_it = patches.dtype.itemsize
    out_it = jnp.dtype(out_dtype).itemsize
    # Sublane pack per element width (f32 -> 8, bf16/f16 -> 16, int8/fp8 -> 32).
    sub = {4: 8, 2: 16, 1: 32}.get(in_it, 8)

    # --- tile-size selection from the real VMEM footprint -------------------
    # Resident operands (weight + bias, constant block index -> fetched once);
    # pipelined operands (patches in, out) are double-buffered by Pallas.
    resident_bytes = (K_pad * N_pad * weight_kn.dtype.itemsize
                      + 8 * N_pad * bias_2d.dtype.itemsize)
    per_row_bytes = 2 * (K_pad * in_it + N_pad * out_it)       # double buffered
    # Budget chosen to stay well under v7x's 64 MiB per-TC VMEM (v5e/v6e: 128 MiB).
    pipelined_budget = max((40 << 20) - 2 * resident_bytes, 4 << 20)
    cap = max(sub, (pipelined_budget // per_row_bytes) // sub * sub)
    cap = min(cap, 2048)

    tm = min(cap, _round_up(M, sub))
    if M > 2 * sub:
        # Keep at least two M blocks so the "parallel" grid axis can feed both
        # TensorCores on v7x (megacore); harmless elsewhere.
        tm = min(tm, _round_up(_cdiv(M, 2), sub))

    M_pad = _round_up(M, tm)
    if M_pad != M or K_pad != K:
        patches = jnp.pad(patches, ((0, M_pad - M), (0, K_pad - K)))

    grid = (M_pad // tm,)

    footprint = 2 * resident_bytes + tm * per_row_bytes
    vmem_limit = int(min(max(32 << 20, footprint + (8 << 20)), 56 << 20))

    out = pl.pallas_call(
        _patch_proj_kernel,
        out_shape=jax.ShapeDtypeStruct((M_pad, N_pad), out_dtype),
        grid_spec=pltpu.PrefetchScalarGridSpec(
            num_scalar_prefetch=0,
            grid=grid,
            in_specs=[
                pl.BlockSpec((tm, K_pad), lambda i: (i, 0)),
                pl.BlockSpec((K_pad, N_pad), lambda i: (0, 0)),   # resident weight
                pl.BlockSpec((1, N_pad), lambda i: (0, 0)),       # resident bias
            ],
            out_specs=pl.BlockSpec((tm, N_pad), lambda i: (i, 0)),
        ),
        compiler_params=pltpu.CompilerParams(
            dimension_semantics=("parallel",),
            vmem_limit_bytes=vmem_limit,
        ),
    )(patches, weight_kn, bias_2d)

    if M_pad != M or N_pad != n_out:
        out = out[:M, :n_out]
    return out


# ------------------------- Fused forward (single jit) -------------------------
@partial(jax.jit, static_argnames=("patch_dims", "padding", "out_channels"))
def _image_to_patch_forward(x, weight_kn_pad, bias_pad_2d, patch_dims, padding,
                            out_channels):
    B, C, H, W = x.shape
    pl_, pr, pt, pb = padding
    if any(padding):
        x = jnp.pad(x, ((0, 0), (0, 0), (pt, pb), (pl_, pr)))   # ZeroPad2d semantics

    ph, pw = patch_dims
    Hp = x.shape[2] // ph
    Wp = x.shape[3] // pw

    # im2col: non-overlapping patches flattened with K ordered (C, ph, pw),
    # matching the Conv2d weight flattening.  Kept inside this jit.
    patches = x.reshape(B, C, Hp, ph, Wp, pw)
    patches = jnp.transpose(patches, (0, 2, 4, 1, 3, 5))        # (B, Hp, Wp, C, ph, pw)
    patches = patches.reshape(B * Hp * Wp, C * ph * pw)         # (M, K)

    out = _patch_projection(patches, weight_kn_pad, bias_pad_2d,
                            x.dtype, out_channels)              # (M, O)

    out = out.reshape(B, Hp, Wp, out_channels)
    # Module contract is NCHW.
    out = jnp.transpose(out, (0, 3, 1, 2))                      # (B, O, Hp, Wp)
    return out


# ------------------------------ Module port -----------------------------------
class ImageToPatch2D:
    """JAX/Pallas port of the PyTorch ImageToPatch2D module (normalization_layer=None)."""

    def __init__(self, img_dims, patch_dims, in_channels, out_channels, key):
        self.img_dims = tuple(img_dims)
        self.patch_dims = tuple(patch_dims)
        self.in_channels = in_channels
        self.out_channels = out_channels

        height, width = img_dims
        patch_h, patch_w = patch_dims
        padding_top = padding_bottom = padding_left = padding_right = 0
        height_mod = height % patch_h
        width_mod = width % patch_w
        if height_mod:
            pad_height = patch_h - height_mod
            padding_top = pad_height // 2
            padding_bottom = pad_height - padding_top
        if width_mod:
            pad_width = patch_w - width_mod
            padding_left = pad_width // 2
            padding_right = pad_width - padding_left
        # ZeroPad2d order: (left, right, top, bottom)
        self.padding = (padding_left, padding_right, padding_top, padding_bottom)

        # Deterministic parameter init mirroring nn.Conv2d defaults
        # (uniform with bound = 1/sqrt(fan_in)).
        fan_in = in_channels * patch_h * patch_w
        bound = 1.0 / math.sqrt(fan_in)
        k_w, k_b = jax.random.split(key)
        # PyTorch Conv2d weight layout: (out_channels, in_channels, ph, pw)
        self.weight = jax.random.uniform(
            k_w, (out_channels, in_channels, patch_h, patch_w),
            minval=-bound, maxval=bound, dtype=jnp.float32)
        self.bias = jax.random.uniform(
            k_b, (out_channels,), minval=-bound, maxval=bound, dtype=jnp.float32)

        # Pre-transposed, pre-padded (K_pad, N_pad) projection matrix (computed once).
        K = in_channels * patch_h * patch_w
        N = out_channels
        self._K = K
        self._K_pad = _round_up(K, 128)
        self._N_pad = _round_up(N, 128)
        w_kn = self.weight.reshape(N, K).T                       # (K, N)
        self.weight_kn_padded = jnp.pad(
            w_kn, ((0, self._K_pad - K), (0, self._N_pad - N)))  # (K_pad, N_pad) f32
        self.bias_padded = jnp.pad(
            self.bias, (0, self._N_pad - N)).reshape(1, self._N_pad).astype(jnp.float32)

        # Per-compute-dtype cache of the cast weight (avoids a per-call cast).
        self._w_cache = {}

    def _weight_for(self, dtype):
        dt = jnp.dtype(dtype)
        w = self._w_cache.get(dt)
        if w is None:
            w = self.weight_kn_padded.astype(dt)
            self._w_cache[dt] = w
        return w

    def __call__(self, x):
        # x: (B, C, H, W)  -- NCHW, matching the PyTorch module.
        B, C, H, W = x.shape
        assert H == self.img_dims[0] and W == self.img_dims[1], (
            f"Input image size ({H}x{W}) does not match model "
            f"({self.img_dims[0]}x{self.img_dims[1]}).")
        return _image_to_patch_forward(
            x, self._weight_for(x.dtype), self.bias_padded,
            self.patch_dims, self.padding, self.out_channels)


# --------------------------------- Demo ---------------------------------------
if __name__ == "__main__":
    key = jax.random.PRNGKey(0)
    k_param, k_param2, k_x, k_x2 = jax.random.split(key, 4)

    # ---- Test 1: divisible spatial dims (no padding path) ----
    B, C, H, W = 2, 4, 16, 16
    patch_dims = (4, 4)
    out_channels = 32

    module = ImageToPatch2D(img_dims=(H, W), patch_dims=patch_dims,
                            in_channels=C, out_channels=out_channels,
                            key=k_param)
    x = jax.random.normal(k_x, (B, C, H, W), dtype=jnp.float32)
    y = jax.block_until_ready(module(x))

    ref = jax.lax.conv_general_dilated(
        x, module.weight, window_strides=patch_dims, padding="VALID",
        dimension_numbers=("NCHW", "OIHW", "NCHW"))
    ref = ref + module.bias.reshape(1, -1, 1, 1)
    assert y.shape == (B, out_channels, H // patch_dims[0], W // patch_dims[1])
    assert jnp.allclose(y, ref, atol=1e-4, rtol=1e-4)

    # ---- Test 2: non-divisible spatial dims (exercises the ZeroPad2d path) ----
    H2, W2 = 15, 13
    module2 = ImageToPatch2D(img_dims=(H2, W2), patch_dims=patch_dims,
                             in_channels=C, out_channels=out_channels,
                             key=k_param2)
    x2 = jax.random.normal(k_x2, (B, C, H2, W2), dtype=jnp.float32)
    y2 = jax.block_until_ready(module2(x2))

    pl_, pr, pt, pb = module2.padding
    x2_padded = jnp.pad(x2, ((0, 0), (0, 0), (pt, pb), (pl_, pr)))
    ref2 = jax.lax.conv_general_dilated(
        x2_padded, module2.weight, window_strides=patch_dims, padding="VALID",
        dimension_numbers=("NCHW", "OIHW", "NCHW"))
    ref2 = ref2 + module2.bias.reshape(1, -1, 1, 1)
    Hp2 = (H2 + pt + pb) // patch_dims[0]
    Wp2 = (W2 + pl_ + pr) // patch_dims[1]
    assert y2.shape == (B, out_channels, Hp2, Wp2)
    assert jnp.allclose(y2, ref2, atol=1e-4, rtol=1e-4)

    print("KERNEL_OK")
</pallas_src>

<mosaic_0001>
module attributes {stable_mosaic.version = 11 : i64} {
  func.func @_patch_proj_kernel(%arg0: i32, %arg1: memref<16x128xf32, #tpu.memory_space<vmem>>, %arg2: memref<128x128xf32, #tpu.memory_space<vmem>>, %arg3: memref<1x128xf32, #tpu.memory_space<vmem>>, %arg4: memref<16x128xf32, #tpu.memory_space<vmem>>) attributes {dimension_semantics = [#tpu.dimension_semantics<parallel>], iteration_bounds = array<i64: 2>, scalar_prefetch = 0 : i64, scratch_operands = 0 : i64, tpu.core_type = #tpu.core_type<tc>, window_params = [{transform_indices = @transform_0, window_bounds = array<i64: 16, 128>}, {pipeline_mode = #tpu.pipeline_mode<synchronous>, transform_indices = @transform_1, window_bounds = array<i64: 128, 128>}, {pipeline_mode = #tpu.pipeline_mode<synchronous>, transform_indices = @transform_2, window_bounds = array<i64: 1, 128>}, {transform_indices = @transform_3, window_bounds = array<i64: 16, 128>}]} {
    %c0 = arith.constant 0 : index
    %c0_0 = arith.constant 0 : index
    %0 = vector.load %arg1[%c0, %c0_0] : memref<16x128xf32, #tpu.memory_space<vmem>>, vector<16x128xf32>
    %c0_1 = arith.constant 0 : index
    %c0_2 = arith.constant 0 : index
    %1 = vector.load %arg2[%c0_1, %c0_2] : memref<128x128xf32, #tpu.memory_space<vmem>>, vector<128x128xf32>
    %cst = arith.constant dense<0.000000e+00> : vector<16x128xf32>
    %2 = tpu.matmul %0, %1, %cst {dimension_numbers = #tpu.dot_dimension_numbers<[1], [0], [0], [1], [0, 0, 1, 1], [], []>} : vector<16x128xf32>, vector<128x128xf32>, vector<16x128xf32> -> vector<16x128xf32>
    %c0_3 = arith.constant 0 : index
    %c0_4 = arith.constant 0 : index
    %3 = vector.load %arg3[%c0_3, %c0_4] : memref<1x128xf32, #tpu.memory_space<vmem>>, vector<1x128xf32>
    %4 = vector.broadcast %3 : vector<1x128xf32> to vector<16x128xf32>
    %5 = arith.addf %2, %4 : vector<16x128xf32>
    %c0_5 = arith.constant 0 : index
    %c0_6 = arith.constant 0 : index
    %6 = vector.load %arg4[%c0_5, %c0_6] : memref<16x128xf32, #tpu.memory_space<vmem>>, vector<16x128xf32>
    tpu.vector_store %arg4[%c0_5, %c0_6], %5 {strides = array<i32>} : memref<16x128xf32, #tpu.memory_space<vmem>>, vector<16x128xf32>,
    return
  }
  func.func @transform_0(%arg0: i32) -> (i32, i32) {
    %c0_i32 = arith.constant 0 : i32
    %c0_i32_0 = arith.constant 0 : i32
    return %arg0, %c0_i32 : i32, i32
  }
  func.func @transform_1(%arg0: i32) -> (i32, i32) {
    %c0_i32 = arith.constant 0 : i32
    %c0_i32_0 = arith.constant 0 : i32
    %c0_i32_1 = arith.constant 0 : i32
    return %c0_i32, %c0_i32_0 : i32, i32
  }
  func.func @transform_2(%arg0: i32) -> (i32, i32) {
    %c0_i32 = arith.constant 0 : i32
    %c0_i32_0 = arith.constant 0 : i32
    %c0_i32_1 = arith.constant 0 : i32
    return %c0_i32, %c0_i32_0 : i32, i32
  }
  func.func @transform_3(%arg0: i32) -> (i32, i32) {
    %c0_i32 = arith.constant 0 : i32
    %c0_i32_0 = arith.constant 0 : i32
    return %arg0, %c0_i32 : i32, i32
  }
}

</mosaic_0001>

<llo_original>
// kernel: _image_to_patch_forward.1
$region0: #{_image_to_patch_forward.1}
  #allocation0 [shape = 'u32[]', space=smem, size = 0x4, offset = 0x4, fixed_abs, tag = 'smem constant byte address 0x4 - core index']
  #allocation1 [shape = 'u32[144,128]{1,0:T(1,128)}', space=vmem, size = 0x12000, scoped, tag = 'internal scratch']
  %s0 = inlined_call_operand.vmem [shape: f32[32,128], index: 0, kind: input, shape index: {}]
  %s1 = inlined_call_operand.vmem [shape: f32[128,128], index: 1, kind: input, shape index: {}]
  %s2 = inlined_call_operand.vmem [shape: f32[1,128], index: 2, kind: input, shape index: {}]
  %s3 = inlined_call_operand.hbm [shape: f32[32,128], index: 3, kind: output, shape index: {}]
  %s4 = sld [smem:[#allocation0]]
  $region45: #{_image_to_patch_forward.1} parent=0
    _
  %s6 = ssub.s32 1, %s4
  %s7 = scalar_select 0, %s6, %s4
  $region1: #{_image_to_patch_forward.1} parent=0
    #allocation2 [shape = 'u8[16384]{0}', space=vmem, size = 0x4000, scoped, tag = 'output window, operand 0']
    #allocation3 [shape = 's32[2]{0}', space=sflag, size = 0x8, scoped, tag = 'scoped memory for _image_to_patch_forward.1']
    %8 = vsyncpa [#allocation3], 0
    %s9 = scalar_lea.sflag [#allocation3], 1
    %10 = vsyncpa %s9, 0
    loop: start=0, step=1, limit=4
    $region2: #{_image_to_patch_forward.1} parent=1 // loop_pre_header
      _
    $region3: #{_image_to_patch_forward.1} parent=1 // loop_header
      %s12 = sphi 0, %s16
      %p13 = scmp.ge.s32.totalorder %s12, 4
      %s22 = sphi 0, %s24
      %s25 = sphi 0, %s22
      %s26 = sphi 0, %s25
      %s42 = sphi 0, %s26
      %s46 = sphi 0, %s46
      %s48 = sphi 0, %s46
      %s49 = sphi 0, %s48
      %s63 = sphi 0, %s49
      %s67 = sphi 0, %s67
      %s69 = sphi 0, %s67
      %s70 = sphi 0, %s69
      %s84 = sphi 0, %s70
      %s90 = sphi 0, %s92
      %s93 = sphi 0, %s90
      %s94 = sphi 0, %s93
      %s110 = sphi 0, %s94
    $region4: #{_image_to_patch_forward.1} parent=1 // loop_header_branch
      %15 = sbr.rel (%p13) target = $region8
    $region5: #{_image_to_patch_forward.1} parent=1 // loop_body
      %s17 = ssub.s32 %s12, 1
      %s18 = ssub.s32 %s12, 2
      %s19 = sadd.s32 %s12, 1
      %s20 = ssub.s32 %s12, %s19
      %p21 = scmp.eq.s32.totalorder %s20, 0
      %s23 = sadd.s32 %s22, 1
      %s24 = scalar_select %p21, %s22, %s23
      %p27 = pneg %p21
      %p28 = scmp.eq.s32.totalorder %s12, 1
      %p29 = por %p27, %p28
      %p30 = scmp.ne.s32.totalorder %s22, %s25
      %p31 = scmp.eq.s32.totalorder %s12, 0
      %p32 = por %p30, %p31
      %p33 = scmp.ne.s32.totalorder %s22, %s25
      %p34 = scmp.eq.s32.totalorder %s17, 1
      %p35 = por %p33, %p34
      %p36 = scmp.ne.s32.totalorder %s25, %s26
      %p37 = scmp.eq.s32.totalorder %s17, 0
      %p38 = por %p36, %p37
      %p39 = scmp.ne.s32.totalorder %s25, %s26
      %p40 = scmp.eq.s32.totalorder %s18, 1
      %p41 = por %p39, %p40
      %p43 = scmp.ne.s32.totalorder %s26, %s42
      %p44 = scmp.eq.s32.totalorder %s18, 0
      %p45 = por %p43, %p44
      %s47 = sadd.s32 %s46, 1
      %p50 = scmp.eq.s32.totalorder %s12, 1
      %p51 = scmp.ne.s32.totalorder %s46, %s48
      %p52 = scmp.eq.s32.totalorder %s12, 0
      %p53 = por %p51, %p52
      %p54 = scmp.ne.s32.totalorder %s46, %s48
      %p55 = scmp.eq.s32.totalorder %s17, 1
      %p56 = por %p54, %p55
      %p57 = scmp.ne.s32.totalorder %s48, %s49
      %p58 = scmp.eq.s32.totalorder %s17, 0
      %p59 = por %p57, %p58
      %p60 = scmp.ne.s32.totalorder %s48, %s49
      %p61 = scmp.eq.s32.totalorder %s18, 1
      %p62 = por %p60, %p61
      %p64 = scmp.ne.s32.totalorder %s49, %s63
      %p65 = scmp.eq.s32.totalorder %s18, 0
      %p66 = por %p64, %p65
      %s68 = sadd.s32 %s67, 1
      %p71 = scmp.eq.s32.totalorder %s12, 1
      %p72 = scmp.ne.s32.totalorder %s67, %s69
      %p73 = scmp.eq.s32.totalorder %s12, 0
      %p74 = por %p72, %p73
      %p75 = scmp.ne.s32.totalorder %s67, %s69
      %p76 = scmp.eq.s32.totalorder %s17, 1
      %p77 = por %p75, %p76
      %p78 = scmp.ne.s32.totalorder %s69, %s70
      %p79 = scmp.eq.s32.totalorder %s17, 0
      %p80 = por %p78, %p79
      %p81 = scmp.ne.s32.totalorder %s69, %s70
      %p82 = scmp.eq.s32.totalorder %s18, 1
      %p83 = por %p81, %p82
      %p85 = scmp.ne.s32.totalorder %s70, %s84
      %p86 = scmp.eq.s32.totalorder %s18, 0
      %p87 = por %p85, %p86
      %s88 = ssub.s32 %s12, %s19
      %p89 = scmp.eq.s32.totalorder %s88, 0
      %s91 = sadd.s32 %s90, 1
      %s92 = scalar_select %p89, %s90, %s91
      %p95 = pneg %p89
      %p96 = scmp.eq.s32.totalorder %s12, 1
      %p97 = por %p95, %p96
      %p98 = scmp.ne.s32.totalorder %s90, %s93
      %p99 = scmp.eq.s32.totalorder %s12, 0
      %p100 = por %p98, %p99
      %p101 = scmp.ne.s32.totalorder %s90, %s93
      %p102 = scmp.eq.s32.totalorder %s17, 1
      %p103 = por %p101, %p102
      %p104 = scmp.ne.s32.totalorder %s93, %s94
      %p105 = scmp.eq.s32.totalorder %s17, 0
      %p106 = por %p104, %p105
      %p107 = scmp.ne.s32.totalorder %s93, %s94
      %p108 = scmp.eq.s32.totalorder %s18, 1
      %p109 = por %p107, %p108
      %p111 = scmp.ne.s32.totalorder %s94, %s110
      %p112 = scmp.eq.s32.totalorder %s18, 0
      %p113 = por %p111, %p112
      %p114 = scmp.le.s32.totalorder 1, %s12
      %p115 = scmp.lt.s32.totalorder %s12, 3
      %p116 = pnand %p114, %p115
      %p117 = pneg %p116
      // Predicated region
      $region9: #{_image_to_patch_forward.1} parent=5 // pred_check
        _
      $region10: #{_image_to_patch_forward.1} parent=5 // pred_check_branch
        %119 = sbr.rel (%p116) target = $region12
      $region11: #{_image_to_patch_forward.1} parent=5 // pred_region
        %s120 = ssub.s32 %s12, 1
        // Predicated region
        $region13: #{_image_to_patch_forward.1} parent=11 // pred_check
          %p121 = pneg %p59
        $region14: #{_image_to_patch_forward.1} parent=11 // pred_check_branch
          %123 = sbr.rel (%p121) target = $region16
        $region15: #{_image_to_patch_forward.1} parent=11 // pred_region
          _
        $region16: #{_image_to_patch_forward.1} parent=11 // pred_fallthru
          _
        // Predicated region
        $region17: #{_image_to_patch_forward.1} parent=11 // pred_check
          %p124 = pneg %p80
        $region18: #{_image_to_patch_forward.1} parent=11 // pred_check_branch
          %126 = sbr.rel (%p124) target = $region20
        $region19: #{_image_to_patch_forward.1} parent=11 // pred_region
          _
        $region20: #{_image_to_patch_forward.1} parent=11 // pred_fallthru
          _
      $region12: #{_image_to_patch_forward.1} parent=5 // pred_fallthru
        _
      %p127 = scmp.lt.s32.totalorder %s12, 2
      // Predicated region
      $region21: #{_image_to_patch_forward.1} parent=5 // pred_check
        %p128 = pneg %p127
      $region22: #{_image_to_patch_forward.1} parent=5 // pred_check_branch
        %130 = sbr.rel (%p128) target = $region24
      $region23: #{_image_to_patch_forward.1} parent=5 // pred_region
        // Predicated region
        $region25: #{_image_to_patch_forward.1} parent=23 // pred_check
          %p131 = pneg %p32
        $region26: #{_image_to_patch_forward.1} parent=23 // pred_check_branch
          %133 = sbr.rel (%p131) target = $region28
        $region27: #{_image_to_patch_forward.1} parent=23 // pred_region
          %s134 = smul.u32 2, %s12
          %p135 = scmp.lt.s32.totalorder %s134, 3
          %s136 = scalar_select %p135, %s134, 3
          %s137 = smul.addr %s136, 8
          %s138 = scalar_lea.vmem %s0, %s137
          %s139 = smul.u32 2, %s12
        $region28: #{_image_to_patch_forward.1} parent=23 // pred_fallthru
          _
      $region24: #{_image_to_patch_forward.1} parent=5 // pred_fallthru
        _
      %p140 = scmp.le.s32.totalorder 1, %s12
      %p141 = scmp.lt.s32.totalorder %s12, 3
      %p142 = pnand %p140, %p141
      %p143 = pneg %p142
      // Predicated region
      $region29: #{_image_to_patch_forward.1} parent=5 // pred_check
        _
      $region30: #{_image_to_patch_forward.1} parent=5 // pred_check_branch
        %145 = sbr.rel (%p142) target = $region32
      $region31: #{_image_to_patch_forward.1} parent=5 // pred_region
        %s146 = ssub.s32 %s12, 1
        %s147 = smul.u32 2, %s17
        %p148 = scmp.lt.s32.totalorder %s147, 3
        %s149 = scalar_select %p148, %s147, 3
        %s150 = smul.addr %s149, 8
        %s151 = scalar_lea.vmem %s0, %s150
        %p152 = pneg %p38
        %p153 = pneg %p35
        %p154 = pneg %p59
        %p155 = pneg %p56
        %p156 = pneg %p80
        %p157 = pneg %p77
        %p158 = pneg %p106
        %p159 = pneg %p103
        %s160 = sand.u32 %s93, 1
        %s161 = scalar_lea.sflag [#allocation3], %s160
        %s162 = sand.u32 %s93, 1
        %s163 = smul.addr %s162, 16
        %s164 = scalar_lea.vmem [#allocation2], %s163
        %s165 = smul.u32 2, %s17
        %p166 = scmp.lt.s32.totalorder %s165, 3
        %s167 = scalar_select %p166, %s165, 3
        %s168 = smul.addr %s167, 8
        %s169 = scalar_lea.vmem %s0, %s168
        %s170 = smul.u32 2, %s17
        %s171 = smul.u32 2, %s17
        %v172 = vld [vmem:[%s169] sm:$0xff]
        %v173 = vld [vmem:[%s169 + $0x8] sm:$0xff]
        %v174 = vld [vmem:[%s1] sm:$0xff]
        %v175 = vld [vmem:[%s1 + $0x8] sm:$0xff]
        %v176 = vld [vmem:[%s1 + $0x10] sm:$0xff]
        %v177 = vld [vmem:[%s1 + $0x18] sm:$0xff]
        %v178 = vld [vmem:[%s1 + $0x20] sm:$0xff]
        %v179 = vld [vmem:[%s1 + $0x28] sm:$0xff]
        %v180 = vld [vmem:[%s1 + $0x30] sm:$0xff]
        %v181 = vld [vmem:[%s1 + $0x38] sm:$0xff]
        %v182 = vld [vmem:[%s1 + $0x40] sm:$0xff]
        %v183 = vld [vmem:[%s1 + $0x48] sm:$0xff]
        %v184 = vld [vmem:[%s1 + $0x50] sm:$0xff]
        %v185 = vld [vmem:[%s1 + $0x58] sm:$0xff]
        %v186 = vld [vmem:[%s1 + $0x60] sm:$0xff]
        %v187 = vld [vmem:[%s1 + $0x68] sm:$0xff]
        %v188 = vld [vmem:[%s1 + $0x70] sm:$0xff]
        %v189 = vld [vmem:[%s1 + $0x78] sm:$0xff]
        %v190 = vld [vmem:[%s2] sm:$0x1]
        %v192 = vlaneseq
        %v193 = vshrl.u32 %v192, 7
        %v194 = vsub.s32 0, %v193
        %v195 = vrot.slane %v190, %v194
        %197 = vmatprep.subr.mxu0 0.0
        %198 = vmatpush1.msra.mxu0 %v189
        %199 = vmatprep.subr.mxu0 0.0
        %200 = vmatpush1.msra.mxu0 %v188
        %201 = vmatprep.subr.mxu0 0.0
        %202 = vmatpush1.msra.mxu0 %v187
        %203 = vmatprep.subr.mxu0 0.0
        %204 = vmatpush1.msra.mxu0 %v186
        %205 = vmatprep.subr.mxu0 0.0
        %206 = vmatpush1.msra.mxu0 %v185
        %207 = vmatprep.subr.mxu0 0.0
        %208 = vmatpush1.msra.mxu0 %v184
        %209 = vmatprep.subr.mxu0 0.0
        %210 = vmatpush1.msra.mxu0 %v183
        %211 = vmatprep.subr.mxu0 0.0
        %212 = vmatpush1.msra.mxu0 %v182
        %213 = vmatprep.subr.mxu0 0.0
        %214 = vmatpush1.msra.mxu0 %v181
        %215 = vmatprep.subr.mxu0 0.0
        %216 = vmatpush1.msra.mxu0 %v180
        %217 = vmatprep.subr.mxu0 0.0
        %218 = vmatpush1.msra.mxu0 %v179
        %219 = vmatprep.subr.mxu0 0.0
        %220 = vmatpush1.msra.mxu0 %v178
        %221 = vmatprep.subr.mxu0 0.0
        %222 = vmatpush1.msra.mxu0 %v177
        %223 = vmatprep.subr.mxu0 0.0
        %224 = vmatpush1.msra.mxu0 %v176
        %225 = vmatprep.subr.mxu0 0.0
        %226 = vmatpush1.msra.mxu0 %v175
        %227 = vmatprep.subr.mxu0 0.0
        %228 = vmatpush1.msra.mxu0 %v174
        %229 = vmatprep.subr.mxu0 0.0
        %230 = vmatpush2.msra.mxu0 0.0
        %231 = vmatprep.subr.mxu0 0.0
        %232 = vmatpush2.msra.mxu0 0.0
        %233 = vmatprep.subr.mxu0 0.0
        %234 = vmatpush2.msra.mxu0 0.0
        %235 = vmatprep.subr.mxu0 0.0
        %236 = vmatpush2.msra.mxu0 0.0
        %237 = vmatprep.subr.mxu0 0.0
        %238 = vmatpush2.msra.mxu0 0.0
        %239 = vmatprep.subr.mxu0 0.0
        %240 = vmatpush2.msra.mxu0 0.0
        %241 = vmatprep.subr.mxu0 0.0
        %242 = vmatpush2.msra.mxu0 0.0
        %243 = vmatprep.subr.mxu0 0.0
        %244 = vmatpush2.msra.mxu0 0.0
        %245 = vmatprep.subr.mxu0 0.0
        %246 = vmatpush2.msra.mxu0 0.0
        %247 = vmatprep.subr.mxu0 0.0
        %248 = vmatpush2.msra.mxu0 0.0
        %249 = vmatprep.subr.mxu0 0.0
        %250 = vmatpush2.msra.mxu0 0.0
        %251 = vmatprep.subr.mxu0 0.0
        %252 = vmatpush2.msra.mxu0 0.0
        %253 = vmatprep.subr.mxu0 0.0
        %254 = vmatpush2.msra.mxu0 0.0
        %255 = vmatprep.subr.mxu0 0.0
        %256 = vmatpush2.msra.mxu0 0.0
        %257 = vmatprep.subr.mxu0 0.0
        %258 = vmatpush2.msra.mxu0 0.0
        %259 = vmatprep.subr.mxu0 0.0
        %260 = vmatpush2.msra.mxu0 0.0
        %261 = vmatprep.mubr.f32.mxu0 0.0
        %262 = vmatmul.mubr.f32.gmra.mxu0 %v172
        %v263 = vpop.f32.mrf.mxu0
        %v264 = vadd.f32 %v195, %v263
        %v265 = vpop.f32.mrf.mxu0
        %266 = vmatprep.mubr.f32.mxu0 0.0
        %267 = vmatmul.mubr.f32.gmra.mxu0 %v173
        %v268 = vpop.f32.mrf.mxu0
        %v269 = vadd.f32 %v195, %v268
        %v270 = vpop.f32.mrf.mxu0
        %271 = vdwg.mxu0
        %272 = vst [vmem:[%s164] sm:$0xff] %v264
        %273 = vst [vmem:[%s164 + $0x8] sm:$0xff] %v269
        %s274 = sand.u32 %s93, 1
        %s275 = scalar_lea.sflag [#allocation3], %s274
        %s276 = sand.u32 %s93, 1
        %s277 = smul.addr %s276, 16
        %s278 = scalar_lea.vmem [#allocation2], %s277
        // Predicated region
        $region33: #{_image_to_patch_forward.1} parent=31 // pred_check
          %p279 = pneg %p103
        $region34: #{_image_to_patch_forward.1} parent=31 // pred_check_branch
          %281 = sbr.rel (%p279) target = $region36
        $region35: #{_image_to_patch_forward.1} parent=31 // pred_region
          %s282 = smul.u32 2, %s17
          %s284 = ssub.s32 256, 256
          %285 = vsyncadd %s275, %s284
          %s286 = smul.addr %s282, 128
          %s287 = scalar_lea.hbm %s3, %s286
          %s288 = sshll.u32 %s278, 4
          %s289 = int_to_ptr.vmem [resolvable:$true] %s288
          %294 = dma.vmem_to_hbm [thread:$0]  %s289, 256, %s287, %s275, 128, 128, 8
        $region36: #{_image_to_patch_forward.1} parent=31 // pred_fallthru
          _
      $region32: #{_image_to_patch_forward.1} parent=5 // pred_fallthru
        _
      %p295 = scmp.le.s32.totalorder 2, %s12
      // Predicated region
      $region37: #{_image_to_patch_forward.1} parent=5 // pred_check
        %p296 = pneg %p295
      $region38: #{_image_to_patch_forward.1} parent=5 // pred_check_branch
        %298 = sbr.rel (%p296) target = $region40
      $region39: #{_image_to_patch_forward.1} parent=5 // pred_region
        %s299 = ssub.s32 %s12, 2
        // Predicated region
        $region41: #{_image_to_patch_forward.1} parent=39 // pred_check
          %p300 = pneg %p109
        $region42: #{_image_to_patch_forward.1} parent=39 // pred_check_branch
          %302 = sbr.rel (%p300) target = $region44
        $region43: #{_image_to_patch_forward.1} parent=39 // pred_region
          %s303 = sand.u32 %s94, 1
          %s304 = scalar_lea.sflag [#allocation3], %s303
          %s305 = sand.u32 %s94, 1
          %s306 = smul.addr %s305, 16
          %s307 = scalar_lea.vmem [#allocation2], %s306
          %308 = dma.done %s304, 256
        $region44: #{_image_to_patch_forward.1} parent=39 // pred_fallthru
          _
      $region40: #{_image_to_patch_forward.1} parent=5 // pred_fallthru
        _
    $region6: #{_image_to_patch_forward.1} parent=1 // loop_footer
      %s16 = sadd.s32 1, %s12
    $region7: #{_image_to_patch_forward.1} parent=1 // loop_footer_branch
      %11 = sbr.rel target = $region3
    $region8: #{_image_to_patch_forward.1} parent=1 // loop_exit
      _
    %309 = vsyncpa [#allocation3], 1
    %s310 = scalar_lea.sflag [#allocation3], 1
    %311 = vsyncpa %s310, 1

</llo_original>
